<compile_context>
chip_gen: v7x
topology: tpu7x:2x2x1
jax: 0.10.0
libtpu: 0.0.40
codegen_flags: <defaults>
</compile_context>

<pallas_src>
import functools
from typing import NamedTuple

import jax
import jax.numpy as jnp
from jax.experimental import pallas as pl
from jax.experimental.pallas import tpu as pltpu


_VMEM_SOFT_CAP = 48 << 20  # keep per-step footprint comfortably under v7x's 64 MiB


def _round_up(n, m):
    return ((n + m - 1) // m) * m


def _cdiv(a, b):
    return -(-a // b)


def _feature_plan(F, max_weight_block_bytes):
    """Lane-dense padded width, feature tile tn (multiple of 128), #tiles."""
    f_pad = _round_up(F, 128)
    m = f_pad // 128
    d = 1
    for cand in range(m, 0, -1):  # largest divisor whose weight block fits budget
        if m % cand == 0 and f_pad * 2 * (128 * cand) * 4 <= max_weight_block_bytes:
            d = cand
            break
    tn = 128 * d
    return f_pad, tn, f_pad // tn


def _vmem_bytes(tb, f_pad, tn, nt):
    """Rough per-step VMEM footprint (f32), incl. pipeline buffers + temps."""
    f32 = 4
    w_bufs = 1 if nt == 1 else 2          # constant W/b single-buffered when nt==1
    x_in = 2 * tb * f_pad * f32           # double-buffered x tile
    xb = (2 * tb * tn * f32) if nt > 1 else 0
    out = 2 * tb * tn * f32
    w = w_bufs * f_pad * 2 * tn * f32
    bias = w_bufs * 2 * tn * f32
    inter = 4 * tb * 2 * tn * f32         # y / g / t / blend temporaries (slack)
    return x_in + xb + out + w + bias + inter


class HighwayParams(NamedTuple):
    w: jax.Array        # (f_pad, 2*f_pad) column-block-interleaved fused weight
    b: jax.Array        # (1, 2*f_pad)     fused bias, same column layout
    features: int       # original F
    f_pad: int
    tn: int              # feature tile (multiple of 128)
    nt: int              # number of feature tiles


def fuse_highway_params(wg, bg, wt, bt, *, max_weight_block_bytes=16 << 20):
    """Pad + fuse Highway parameters once (hoist out of the per-call path).

    wg, wt: (F, F) pre-transposed so the kernel computes x @ W + b.
    bg, bt: (F,) or (1, F).
    """
    F = wg.shape[0]
    assert wg.shape == (F, F) and wt.shape == (F, F)
    f_pad, tn, nt = _feature_plan(F, max_weight_block_bytes)

    bg = jnp.asarray(bg).reshape(1, F)
    bt = jnp.asarray(bt).reshape(1, F)
    pad2 = ((0, f_pad - F), (0, f_pad - F))
    wg_p = jnp.pad(jnp.asarray(wg), pad2)
    wt_p = jnp.pad(jnp.asarray(wt), pad2)
    bg_p = jnp.pad(bg, ((0, 0), (0, f_pad - F)))
    bt_p = jnp.pad(bt, ((0, 0), (0, f_pad - F)))

    # Column-block interleave: fused block j = [Wg cols j*tn:(j+1)*tn | Wt same].
    w_cat = jnp.stack(
        [wg_p.reshape(f_pad, nt, tn), wt_p.reshape(f_pad, nt, tn)], axis=2
    ).reshape(f_pad, 2 * f_pad)
    b_cat = jnp.stack(
        [bg_p.reshape(1, nt, tn), bt_p.reshape(1, nt, tn)], axis=2
    ).reshape(1, 2 * f_pad)
    return HighwayParams(w_cat, b_cat, F, f_pad, tn, nt)


def _highway_kernel(split_blend, x_ref, w_ref, b_ref, *rest):
    if split_blend:
        xb_ref, o_ref = rest
    else:
        (o_ref,) = rest

    x = x_ref[...]                                            # (tb, f_pad)
    # One fused MXU matmul per feature tile: (tb, f_pad) @ (f_pad, 2*tn).
    y = jnp.dot(x, w_ref[...], preferred_element_type=jnp.float32) + b_ref[...]
    tn = o_ref.shape[-1]                                      # static block width
    # sigmoid(z) == 0.5*tanh(0.5*z) + 0.5 exactly: single EUP op, no exp+divide.
    g = 0.5 * jnp.tanh(0.5 * y[:, :tn]) + 0.5                 # gate
    t = jnp.maximum(y[:, tn:], 0.0)                           # ReLU transform
    xb = xb_ref[...] if split_blend else x                    # x cols for this tile
    # g*t + (1-g)*x  ==  x + g*(t - x)   (one fewer multiply)
    o_ref[...] = (xb + g * (t - xb)).astype(o_ref.dtype)


def highway(x, params: HighwayParams, *, max_batch_tile=1024):
    B, F = x.shape
    assert F == params.features, "x feature dim does not match fused params"
    f_pad, tn, nt = params.f_pad, params.tn, params.nt

    # ---- batch tiling plan ----
    # Minimize padding (tb ~ cdiv(B, n_tiles)) and guarantee >= 2 tiles when
    # B >= 16 so v7x's two TensorCores both get work.
    n_b = max(_cdiv(B, max_batch_tile), 2 if B >= 16 else 1)
    tb = _round_up(_cdiv(B, n_b), 8)
    while tb > 8 and _vmem_bytes(tb, f_pad, tn, nt) > _VMEM_SOFT_CAP:
        tb = _round_up(max(8, tb // 2), 8)
    b_pad = _round_up(B, tb)
    grid = (b_pad // tb, nt)

    needs_pad = (b_pad != B) or (f_pad != F)
    x_p = jnp.pad(x, ((0, b_pad - B), (0, f_pad - F))) if needs_pad else x

    split_blend = nt > 1
    # Grid-invariant weight/bias: single-buffer to halve resident VMEM.
    w_mode = {} if split_blend else dict(pipeline_mode=pl.Buffered(1))
    in_specs = [
        pl.BlockSpec((tb, f_pad), lambda i, j: (i, 0)),                 # x (resident over j)
        pl.BlockSpec((f_pad, 2 * tn), lambda i, j: (0, j), **w_mode),   # fused W block
        pl.BlockSpec((1, 2 * tn), lambda i, j: (0, j), **w_mode),       # fused b block
    ]
    args = (x_p, params.w, params.b)
    if split_blend:
        # Column tile of x for the blend (avoids dynamic lane slicing in-kernel).
        in_specs.append(pl.BlockSpec((tb, tn), lambda i, j: (i, j)))
        args = args + (x_p,)

    vmem_limit = int(min(128 << 20,
                         max(32 << 20, 1.25 * _vmem_bytes(tb, f_pad, tn, nt))))

    out = pl.pallas_call(
        functools.partial(_highway_kernel, split_blend),
        out_shape=jax.ShapeDtypeStruct((b_pad, f_pad), x.dtype),
        grid_spec=pltpu.PrefetchScalarGridSpec(
            num_scalar_prefetch=0,
            grid=grid,
            in_specs=in_specs,
            out_specs=pl.BlockSpec((tb, tn), lambda i, j: (i, j)),
        ),
        compiler_params=pltpu.CompilerParams(
            dimension_semantics=("parallel", "parallel"),
            vmem_limit_bytes=vmem_limit,
        ),
    )(*args)
    return out[:B, :F] if needs_pad else out


def highway_ref(x, wg, bg, wt, bt):
    g = jax.nn.sigmoid(x @ wg + bg)
    t = jnp.maximum(x @ wt + bt, 0.0)
    return g * t + (1.0 - g) * x


if __name__ == "__main__":
    key = jax.random.PRNGKey(0)
    kx1, kx2, kx3, kp1, kp2 = jax.random.split(key, 5)

    def make_raw_params(k, F):
        kwg, kbg, kwt, kbt = jax.random.split(k, 4)
        bound = 1.0 / (F ** 0.5)  # matches nn.Linear's uniform init range
        wg = jax.random.uniform(kwg, (F, F), jnp.float32, -bound, bound)
        bg = jax.random.uniform(kbg, (F,), jnp.float32, -bound, bound)
        wt = jax.random.uniform(kwt, (F, F), jnp.float32, -bound, bound)
        bt = jax.random.uniform(kbt, (F,), jnp.float32, -bound, bound)
        return wg, bg, wt, bt

    # --- case 1: module-sized demo (batch=8, in_features=32), single tile ---
    F = 32
    wg, bg, wt, bt = make_raw_params(kp1, F)
    fused = fuse_highway_params(wg, bg, wt, bt)          # fuse once (hoisted)
    x1 = jax.random.normal(kx1, (8, F), dtype=jnp.float32)
    out1 = jax.block_until_ready(highway(x1, fused))
    ref1 = highway_ref(x1, wg, bg, wt, bt)
    assert out1.shape == x1.shape
    assert jnp.allclose(out1, ref1, atol=1e-5, rtol=1e-5), "mismatch (case 1)"

    # --- case 2: multi batch-tile path (grid_b > 1), reusing the same fused params ---
    x2 = jax.random.normal(kx2, (24, F), dtype=jnp.float32)
    out2 = jax.block_until_ready(highway(x2, fused, max_batch_tile=8))
    ref2 = highway_ref(x2, wg, bg, wt, bt)
    assert out2.shape == x2.shape
    assert jnp.allclose(out2, ref2, atol=1e-5, rtol=1e-5), "mismatch (case 2)"

    # --- case 3: feature-tiled (nt > 1) path, exercising the large-F layout ---
    F3 = 256
    wg3, bg3, wt3, bt3 = make_raw_params(kp2, F3)
    fused3 = fuse_highway_params(wg3, bg3, wt3, bt3,
                                 max_weight_block_bytes=256 * 1024)  # force nt=2
    x3 = jax.random.normal(kx3, (16, F3), dtype=jnp.float32)
    out3 = jax.block_until_ready(highway(x3, fused3))
    ref3 = highway_ref(x3, wg3, bg3, wt3, bt3)
    assert out3.shape == x3.shape
    assert jnp.allclose(out3, ref3, atol=1e-5, rtol=1e-5), "mismatch (case 3)"

    print("KERNEL_OK")
</pallas_src>

<mosaic_0001>
module attributes {stable_mosaic.version = 11 : i64} {
  func.func @_highway_kernel(%arg0: i32, %arg1: i32, %arg2: memref<8x128xf32, #tpu.memory_space<vmem>>, %arg3: memref<128x256xf32, #tpu.memory_space<vmem>>, %arg4: memref<1x256xf32, #tpu.memory_space<vmem>>, %arg5: memref<8x128xf32, #tpu.memory_space<vmem>>) attributes {dimension_semantics = [#tpu.dimension_semantics<parallel>, #tpu.dimension_semantics<parallel>], iteration_bounds = array<i64: 1, 1>, scalar_prefetch = 0 : i64, scratch_operands = 0 : i64, tpu.core_type = #tpu.core_type<tc>, window_params = [{transform_indices = @transform_0, window_bounds = array<i64: 8, 128>}, {pipeline_mode = #tpu.pipeline_mode<synchronous>, transform_indices = @transform_1, window_bounds = array<i64: 128, 256>}, {pipeline_mode = #tpu.pipeline_mode<synchronous>, transform_indices = @transform_2, window_bounds = array<i64: 1, 256>}, {transform_indices = @transform_3, window_bounds = array<i64: 8, 128>}]} {
    %c0 = arith.constant 0 : index
    %c0_0 = arith.constant 0 : index
    %0 = vector.load %arg2[%c0, %c0_0] : memref<8x128xf32, #tpu.memory_space<vmem>>, vector<8x128xf32>
    %c0_1 = arith.constant 0 : index
    %c0_2 = arith.constant 0 : index
    %1 = vector.load %arg3[%c0_1, %c0_2] : memref<128x256xf32, #tpu.memory_space<vmem>>, vector<128x256xf32>
    %cst = arith.constant dense<0.000000e+00> : vector<8x256xf32>
    %2 = tpu.matmul %0, %1, %cst {dimension_numbers = #tpu.dot_dimension_numbers<[1], [0], [0], [1], [0, 0, 1, 1], [], []>} : vector<8x128xf32>, vector<128x256xf32>, vector<8x256xf32> -> vector<8x256xf32>
    %c0_3 = arith.constant 0 : index
    %c0_4 = arith.constant 0 : index
    %3 = vector.load %arg4[%c0_3, %c0_4] : memref<1x256xf32, #tpu.memory_space<vmem>>, vector<1x256xf32>
    %4 = vector.broadcast %3 : vector<1x256xf32> to vector<8x256xf32>
    %5 = arith.addf %2, %4 : vector<8x256xf32>
    %6 = vector.extract_strided_slice %5 {offsets = [0, 0], sizes = [8, 128], strides = [1, 1]} : vector<8x256xf32> to vector<8x128xf32>
    %cst_5 = arith.constant 5.000000e-01 : f32
    %7 = vector.broadcast %cst_5 : f32 to vector<8x128xf32>
    %8 = arith.mulf %7, %6 : vector<8x128xf32>
    %9 = math.tanh %8 : vector<8x128xf32>
    %cst_6 = arith.constant 5.000000e-01 : f32
    %10 = vector.broadcast %cst_6 : f32 to vector<8x128xf32>
    %11 = arith.mulf %10, %9 : vector<8x128xf32>
    %cst_7 = arith.constant 5.000000e-01 : f32
    %12 = vector.broadcast %cst_7 : f32 to vector<8x128xf32>
    %13 = arith.addf %11, %12 : vector<8x128xf32>
    %14 = vector.extract_strided_slice %5 {offsets = [0, 128], sizes = [8, 128], strides = [1, 1]} : vector<8x256xf32> to vector<8x128xf32>
    %cst_8 = arith.constant 0.000000e+00 : f32
    %15 = vector.broadcast %cst_8 : f32 to vector<8x128xf32>
    %16 = arith.maximumf %14, %15 : vector<8x128xf32>
    %17 = arith.subf %16, %0 : vector<8x128xf32>
    %18 = arith.mulf %13, %17 : vector<8x128xf32>
    %19 = arith.addf %0, %18 : vector<8x128xf32>
    %c0_9 = arith.constant 0 : index
    %c0_10 = arith.constant 0 : index
    %20 = vector.load %arg5[%c0_9, %c0_10] : memref<8x128xf32, #tpu.memory_space<vmem>>, vector<8x128xf32>
    tpu.vector_store %arg5[%c0_9, %c0_10], %19 {strides = array<i32>} : memref<8x128xf32, #tpu.memory_space<vmem>>, vector<8x128xf32>,
    return
  }
  func.func @transform_0(%arg0: i32, %arg1: i32) -> (i32, i32) {
    %c0_i32 = arith.constant 0 : i32
    %c0_i32_0 = arith.constant 0 : i32
    return %arg0, %c0_i32 : i32, i32
  }
  func.func @transform_1(%arg0: i32, %arg1: i32) -> (i32, i32) {
    %c0_i32 = arith.constant 0 : i32
    %c0_i32_0 = arith.constant 0 : i32
    return %c0_i32, %arg1 : i32, i32
  }
  func.func @transform_2(%arg0: i32, %arg1: i32) -> (i32, i32) {
    %c0_i32 = arith.constant 0 : i32
    %c0_i32_0 = arith.constant 0 : i32
    return %c0_i32, %arg1 : i32, i32
  }
  func.func @transform_3(%arg0: i32, %arg1: i32) -> (i32, i32) {
    %c0_i32 = arith.constant 0 : i32
    return %arg0, %arg1 : i32, i32
  }
}

</mosaic_0001>

<llo_original>
// kernel: tpu_custom_call.1
$region0: #{tpu_custom_call.1}
  #allocation0 [shape = 'u32[]', space=smem, size = 0x4, offset = 0x4, fixed_abs, tag = 'smem constant byte address 0x4 - core index']
  #allocation1 [shape = 'u32[144,128]{1,0:T(1,128)}', space=vmem, size = 0x12000, scoped, tag = 'internal scratch']
  %s0 = inlined_call_operand.hbm [shape: f32[8,128], index: 0, kind: input, shape index: {}]
  %s1 = inlined_call_operand.hbm [shape: f32[128,256], index: 1, kind: input, shape index: {}]
  %s2 = inlined_call_operand.vmem [shape: f32[1,256], index: 2, kind: input, shape index: {}]
  %s3 = inlined_call_operand.hbm [shape: f32[8,128], index: 3, kind: output, shape index: {}]
  %s4 = sld [smem:[#allocation0]]
  $region30: #{tpu_custom_call.1} parent=0
    _
  %s6 = ssub.s32 1, %s4
  %s7 = scalar_select 0, %s6, %s4
  $region1: #{tpu_custom_call.1} parent=0
    #allocation2 [shape = 'u8[4096]{0}', space=vmem, size = 0x1000, scoped, tag = 'input window, operand 0, single buffered']
    #allocation3 [shape = 's32[1]{0}', space=sflag, size = 0x4, scoped, tag = 'scoped memory for tpu_custom_call.1']
    #allocation4 [shape = 's32[1]{0}', space=sflag, size = 0x4, scoped, tag = 'scoped memory for tpu_custom_call.1']
    #allocation5 [shape = 'u8[131072]{0}', space=vmem, size = 0x20000, scoped, tag = 'input window, operand 1, single buffered']
    #allocation6 [shape = 's32[1]{0}', space=sflag, size = 0x4, scoped, tag = 'scoped memory for tpu_custom_call.1']
    #allocation7 [shape = 'u8[4096]{0}', space=vmem, size = 0x1000, scoped, tag = 'output window, operand 0, single buffered']
    %8 = vsyncpa [#allocation3], 0
    %9 = vsyncpa [#allocation6], 0
    %10 = vsyncpa [#allocation4], 0
    // Predicated region
    $region2: #{tpu_custom_call.1} parent=1 // pred_check
      _
    $region3: #{tpu_custom_call.1} parent=1 // pred_check_branch
      %12 = sbr.rel (0) target = $region5
    $region4: #{tpu_custom_call.1} parent=1 // pred_region
      %s14 = ssub.s32 128, 128
      %15 = vsyncadd [#allocation3], %s14
      %s17 = sshll.u32 [#allocation2], 4
      %s18 = int_to_ptr.vmem [resolvable:$true] %s17
      %20 = dma.hbm_to_vmem [thread:$0]  %s0, 128, %s18, [#allocation3]
    $region5: #{tpu_custom_call.1} parent=1 // pred_fallthru
      _
    // Predicated region
    $region6: #{tpu_custom_call.1} parent=1 // pred_check
      _
    $region7: #{tpu_custom_call.1} parent=1 // pred_check_branch
      %22 = sbr.rel (0) target = $region9
    $region8: #{tpu_custom_call.1} parent=1 // pred_region
      %s24 = ssub.s32 4096, 4096
      %25 = vsyncadd [#allocation6], %s24
      %s26 = sshll.u32 [#allocation5], 4
      %s27 = int_to_ptr.vmem [resolvable:$true] %s26
      %32 = dma.hbm_to_vmem [thread:$0]  %s1, 4096, %s27, [#allocation6], 256, 256, 16
    $region9: #{tpu_custom_call.1} parent=1 // pred_fallthru
      _
    // Predicated region
    $region10: #{tpu_custom_call.1} parent=1 // pred_check
      _
    $region11: #{tpu_custom_call.1} parent=1 // pred_check_branch
      %34 = sbr.rel (0) target = $region13
    $region12: #{tpu_custom_call.1} parent=1 // pred_region
      _
    $region13: #{tpu_custom_call.1} parent=1 // pred_fallthru
      _
    // Predicated region
    $region14: #{tpu_custom_call.1} parent=1 // pred_check
      _
    $region15: #{tpu_custom_call.1} parent=1 // pred_check_branch
      %36 = sbr.rel (0) target = $region17
    $region16: #{tpu_custom_call.1} parent=1 // pred_region
      %37 = dma.done [#allocation3], 128
    $region17: #{tpu_custom_call.1} parent=1 // pred_fallthru
      _
    // Predicated region
    $region18: #{tpu_custom_call.1} parent=1 // pred_check
      _
    $region19: #{tpu_custom_call.1} parent=1 // pred_check_branch
      %39 = sbr.rel (0) target = $region21
    $region20: #{tpu_custom_call.1} parent=1 // pred_region
      %40 = dma.done [#allocation6], 4096
    $region21: #{tpu_custom_call.1} parent=1 // pred_fallthru
      _
    %v41 = vld [vmem:[#allocation2] sm:$0xff]
    %v42 = vld [vmem:[#allocation5] sm:$0xff]
    %v43 = vld [vmem:[#allocation5 + $0x8] sm:$0xff]
    %v44 = vld [vmem:[#allocation5 + $0x10] sm:$0xff]
    %v45 = vld [vmem:[#allocation5 + $0x18] sm:$0xff]
    %v46 = vld [vmem:[#allocation5 + $0x20] sm:$0xff]
    %v47 = vld [vmem:[#allocation5 + $0x28] sm:$0xff]
    %v48 = vld [vmem:[#allocation5 + $0x30] sm:$0xff]
    %v49 = vld [vmem:[#allocation5 + $0x38] sm:$0xff]
    %v50 = vld [vmem:[#allocation5 + $0x40] sm:$0xff]
    %v51 = vld [vmem:[#allocation5 + $0x48] sm:$0xff]
    %v52 = vld [vmem:[#allocation5 + $0x50] sm:$0xff]
    %v53 = vld [vmem:[#allocation5 + $0x58] sm:$0xff]
    %v54 = vld [vmem:[#allocation5 + $0x60] sm:$0xff]
    %v55 = vld [vmem:[#allocation5 + $0x68] sm:$0xff]
    %v56 = vld [vmem:[#allocation5 + $0x70] sm:$0xff]
    %v57 = vld [vmem:[#allocation5 + $0x78] sm:$0xff]
    %v58 = vld [vmem:[#allocation5 + $0x80] sm:$0xff]
    %v59 = vld [vmem:[#allocation5 + $0x88] sm:$0xff]
    %v60 = vld [vmem:[#allocation5 + $0x90] sm:$0xff]
    %v61 = vld [vmem:[#allocation5 + $0x98] sm:$0xff]
    %v62 = vld [vmem:[#allocation5 + $0xa0] sm:$0xff]
    %v63 = vld [vmem:[#allocation5 + $0xa8] sm:$0xff]
    %v64 = vld [vmem:[#allocation5 + $0xb0] sm:$0xff]
    %v65 = vld [vmem:[#allocation5 + $0xb8] sm:$0xff]
    %v66 = vld [vmem:[#allocation5 + $0xc0] sm:$0xff]
    %v67 = vld [vmem:[#allocation5 + $0xc8] sm:$0xff]
    %v68 = vld [vmem:[#allocation5 + $0xd0] sm:$0xff]
    %v69 = vld [vmem:[#allocation5 + $0xd8] sm:$0xff]
    %v70 = vld [vmem:[#allocation5 + $0xe0] sm:$0xff]
    %v71 = vld [vmem:[#allocation5 + $0xe8] sm:$0xff]
    %v72 = vld [vmem:[#allocation5 + $0xf0] sm:$0xff]
    %v73 = vld [vmem:[#allocation5 + $0xf8] sm:$0xff]
    %v74 = vld [vmem:[%s2] sm:$0x3]
    %v76 = vlaneseq
    %v77 = vshrl.u32 %v76, 7
    %v78 = vsub.s32 0, %v77
    %v79 = vrot.slane %v74, %v78
    %v80 = vlaneseq
    %v81 = vshrl.u32 %v80, 7
    %v82 = vsub.s32 1, %v81
    %v83 = vrot.slane %v74, %v82
    %86 = vmatprep.subr.mxu0 %v43
    %87 = vmatpush1.msra.mxu0 %v42
    %88 = vmatprep.subr.mxu0 %v45
    %89 = vmatpush1.msra.mxu0 %v44
    %90 = vmatprep.subr.mxu0 %v47
    %91 = vmatpush1.msra.mxu0 %v46
    %92 = vmatprep.subr.mxu0 %v49
    %93 = vmatpush1.msra.mxu0 %v48
    %94 = vmatprep.subr.mxu0 %v51
    %95 = vmatpush1.msra.mxu0 %v50
    %96 = vmatprep.subr.mxu0 %v53
    %97 = vmatpush1.msra.mxu0 %v52
    %98 = vmatprep.subr.mxu0 %v55
    %99 = vmatpush1.msra.mxu0 %v54
    %100 = vmatprep.subr.mxu0 %v57
    %101 = vmatpush1.msra.mxu0 %v56
    %102 = vmatprep.subr.mxu0 %v59
    %103 = vmatpush1.msra.mxu0 %v58
    %104 = vmatprep.subr.mxu0 %v61
    %105 = vmatpush1.msra.mxu0 %v60
    %106 = vmatprep.subr.mxu0 %v63
    %107 = vmatpush1.msra.mxu0 %v62
    %108 = vmatprep.subr.mxu0 %v65
    %109 = vmatpush1.msra.mxu0 %v64
    %110 = vmatprep.subr.mxu0 %v67
    %111 = vmatpush1.msra.mxu0 %v66
    %112 = vmatprep.subr.mxu0 %v69
    %113 = vmatpush1.msra.mxu0 %v68
    %114 = vmatprep.subr.mxu0 %v71
    %115 = vmatpush1.msra.mxu0 %v70
    %116 = vmatprep.subr.mxu0 %v73
    %117 = vmatpush1.msra.mxu0 %v72
    %118 = vmatprep.subr.mxu0 0.0
    %119 = vmatpush1.msra.mxu0 0.0
    %120 = vmatprep.subr.mxu0 0.0
    %121 = vmatpush1.msra.mxu0 0.0
    %122 = vmatprep.subr.mxu0 0.0
    %123 = vmatpush1.msra.mxu0 0.0
    %124 = vmatprep.subr.mxu0 0.0
    %125 = vmatpush1.msra.mxu0 0.0
    %126 = vmatprep.subr.mxu0 0.0
    %127 = vmatpush1.msra.mxu0 0.0
    %128 = vmatprep.subr.mxu0 0.0
    %129 = vmatpush1.msra.mxu0 0.0
    %130 = vmatprep.subr.mxu0 0.0
    %131 = vmatpush1.msra.mxu0 0.0
    %132 = vmatprep.subr.mxu0 0.0
    %133 = vmatpush1.msra.mxu0 0.0
    %134 = vmatprep.subr.mxu0 0.0
    %135 = vmatpush1.msra.mxu0 0.0
    %136 = vmatprep.subr.mxu0 0.0
    %137 = vmatpush1.msra.mxu0 0.0
    %138 = vmatprep.subr.mxu0 0.0
    %139 = vmatpush1.msra.mxu0 0.0
    %140 = vmatprep.subr.mxu0 0.0
    %141 = vmatpush1.msra.mxu0 0.0
    %142 = vmatprep.subr.mxu0 0.0
    %143 = vmatpush1.msra.mxu0 0.0
    %144 = vmatprep.subr.mxu0 0.0
    %145 = vmatpush1.msra.mxu0 0.0
    %146 = vmatprep.subr.mxu0 0.0
    %147 = vmatpush1.msra.mxu0 0.0
    %148 = vmatprep.subr.mxu0 0.0
    %149 = vmatpush1.msra.mxu0 0.0
    %150 = vmatprep.mubr.f32.mxu0 0.0
    %151 = vmatmul.mubr.f32.gmra.mrb[0].mxu0 %v41
    %v152 = vpop.f32.mrb[0].mxu0
    %v153 = vadd.f32 %v79, %v152
    %v154 = vpop.f32.mrb[0].mxu0
    %v155 = vadd.f32 %v83, %v154
    %156 = vdwg.mxu0
    %v157 = vmul.f32 %v153, 0.5
    %v158 = vtanh.pop %v157
    %v159 = vmul.f32 %v158, 0.5
    %v160 = vadd.f32 %v159, 0.5
    %v161 = vmax.f32 %v155, 0.0
    %v162 = vsub.f32 %v161, %v41
    %v163 = vmul.f32 %v160, %v162
    %v164 = vadd.f32 %v41, %v163
    %165 = vst [vmem:[#allocation7] sm:$0xff] %v164
    // Predicated region
    $region22: #{tpu_custom_call.1} parent=1 // pred_check
      _
    $region23: #{tpu_custom_call.1} parent=1 // pred_check_branch
      %167 = sbr.rel (0) target = $region25
    $region24: #{tpu_custom_call.1} parent=1 // pred_region
      %s169 = ssub.s32 128, 128
      %170 = vsyncadd [#allocation4], %s169
      %s172 = sshll.u32 [#allocation7], 4
      %s173 = int_to_ptr.vmem [resolvable:$true] %s172
      %175 = dma.vmem_to_hbm [thread:$0]  %s173, 128, %s3, [#allocation4]
    $region25: #{tpu_custom_call.1} parent=1 // pred_fallthru
      _
    // Predicated region
    $region26: #{tpu_custom_call.1} parent=1 // pred_check
      _
    $region27: #{tpu_custom_call.1} parent=1 // pred_check_branch
      %177 = sbr.rel (0) target = $region29
    $region28: #{tpu_custom_call.1} parent=1 // pred_region
      %178 = dma.done [#allocation4], 128
    $region29: #{tpu_custom_call.1} parent=1 // pred_fallthru
      _
    %179 = vsyncpa [#allocation3], 1
    %180 = vsyncpa [#allocation6], 1
    %181 = vsyncpa [#allocation4], 1

</llo_original>
